<compile_context>
chip_gen: v7x
topology: tpu7x:2x2x1
jax: 0.10.0
libtpu: 0.0.40
codegen_flags: <defaults>
</compile_context>

<pallas_src>
import functools

import jax
import jax.numpy as jnp
from jax import lax
from jax.experimental import pallas as pl
from jax.experimental.pallas import tpu as pltpu


def _fps_kernel(points_ref, out_ref, ptsf_ref, dists_ref, *, num_sample):
    """One batch element per grid step.

    points_ref: (1, C, N) input tile  (N on the lane axis -> lane-dense)
    out_ref   : (1, S, C) output tile (samples along sublanes, C on lanes)
    ptsf_ref  : (C, N) f32 VMEM scratch (point cloud cast to f32 once per batch)
    dists_ref : (1, N) f32 VMEM scratch (running min squared distance)
    """
    c, n = ptsf_ref.shape
    lane_iota = lax.broadcasted_iota(jnp.int32, (1, n), 1)   # point index per lane

    # Stage the point tile into f32 scratch once (pay any dtype cast exactly once).
    ptsf_ref[...] = points_ref[0].astype(jnp.float32)
    dists_ref[...] = jnp.full((1, n), 1e10, dtype=jnp.float32)

    def body(i, farthest):
        pts = ptsf_ref[...]                                   # (C, N)
        # Gather the currently-selected point with a masked lane-reduce: one XLU
        # pass handles all C channels in parallel (channels live on sublanes).
        mask = lane_iota == farthest                          # (1, N)
        sel = jnp.sum(jnp.where(mask, pts, 0.0), axis=1, keepdims=True)   # (C, 1)
        # Emit the selected sample row; tiny store, off the loop-carried dep chain.
        out_ref[0, pl.ds(i, 1), :] = jnp.transpose(sel).astype(out_ref.dtype)
        # Squared distance of every point to the selected one: lane-dense VALU work
        # plus a single cheap cross-sublane reduce over the C channel rows.
        d = jnp.sum((pts - sel) ** 2, axis=0, keepdims=True)  # (1, N)
        dists = jnp.minimum(dists_ref[...], d)
        dists_ref[...] = dists
        # argmax with first-occurrence tie-breaking (matches jnp.argmax).
        max_d = jnp.max(dists)
        return jnp.min(jnp.where(dists == max_d, lane_iota, n)).astype(jnp.int32)

    # TODO(synk): vectorize over a small batch tile (8-16 chains per grid step) to
    # hide the serial argmax latency on top of the lane-dense layout.
    lax.fori_loop(0, num_sample, body, jnp.int32(0))


def farthest_point_sampling_and_gather(points, num_sample):
    """points: (B, C, N) -> samples: (B, C, num_sample)."""
    b, c, n = points.shape
    kernel = functools.partial(_fps_kernel, num_sample=num_sample)
    out_sc = pl.pallas_call(
        kernel,
        out_shape=jax.ShapeDtypeStruct((b, num_sample, c), points.dtype),
        grid=(b,),
        in_specs=[pl.BlockSpec((1, c, n), lambda i: (i, 0, 0))],
        out_specs=pl.BlockSpec((1, num_sample, c), lambda i: (i, 0, 0)),
        scratch_shapes=[pltpu.VMEM((c, n), jnp.float32),
                        pltpu.VMEM((1, n), jnp.float32)],
        compiler_params=pltpu.CompilerParams(dimension_semantics=("parallel",)),
    )(points)
    # Only the small (B, S, C) result is transposed back to channel-first.
    return jnp.transpose(out_sc, (0, 2, 1))


class FarthestPointSampling:
    """JAX/Pallas equivalent of vision3d.modules.geometry.FarthestPointSampling."""

    def __init__(self, num_sample):
        self.num_sample = num_sample

    def __call__(self, points):
        return farthest_point_sampling_and_gather(points, self.num_sample)


def _fps_reference(points, num_sample):
    """Pure-JAX reference of farthest_point_sampling_and_gather (B, C, N) -> (B, C, S)."""

    def one(pts_cn):                                  # (C, N)
        n = pts_cn.shape[1]

        def body(i, carry):
            dists, farthest, idx = carry
            idx = idx.at[i].set(farthest)
            sel = lax.dynamic_slice_in_dim(pts_cn, farthest, 1, axis=1)  # (C, 1)
            d = jnp.sum((pts_cn.astype(jnp.float32) - sel.astype(jnp.float32)) ** 2, axis=0)
            dists = jnp.minimum(dists, d)
            farthest = jnp.argmax(dists).astype(jnp.int32)
            return dists, farthest, idx

        init = (jnp.full((n,), 1e10, dtype=jnp.float32), jnp.int32(0),
                jnp.zeros((num_sample,), jnp.int32))
        _, _, idx = lax.fori_loop(0, num_sample, body, init)
        return jnp.take(pts_cn, idx, axis=1)

    return jax.vmap(one)(points)


if __name__ == "__main__":
    key = jax.random.PRNGKey(0)
    B, C, N = 2, 3, 16
    num_sample = 8

    points = jax.random.normal(key, (B, C, N), dtype=jnp.float32)

    module = FarthestPointSampling(num_sample)
    samples = module(points)
    samples = jax.block_until_ready(samples)

    ref = jax.block_until_ready(_fps_reference(points, num_sample))

    assert samples.shape == (B, C, num_sample), samples.shape
    assert samples.dtype == points.dtype
    assert jnp.allclose(samples, ref, atol=1e-5, rtol=1e-5), (samples, ref)

    print("KERNEL_OK")
</pallas_src>

<mosaic_0001>
module attributes {stable_mosaic.version = 11 : i64} {
  func.func @_fps_kernel(%arg0: i32, %arg1: memref<1x3x16xf32, #tpu.memory_space<vmem>>, %arg2: memref<1x8x3xf32, #tpu.memory_space<vmem>>, %arg3: memref<3x16xf32, #tpu.memory_space<vmem>>, %arg4: memref<1x16xf32, #tpu.memory_space<vmem>>) attributes {dimension_semantics = [#tpu.dimension_semantics<parallel>], iteration_bounds = array<i64: 2>, scalar_prefetch = 0 : i64, scratch_operands = 2 : i64, tpu.core_type = #tpu.core_type<tc>, window_params = [{transform_indices = @transform_0, window_bounds = array<i64: 1, 3, 16>}, {transform_indices = @transform_1, window_bounds = array<i64: 1, 8, 3>}]} {
    %0 = tpu.iota {dimensions = array<i32: 1>} : vector<1x16xi32>
    %c0 = arith.constant 0 : index
    %c0_0 = arith.constant 0 : index
    %c0_1 = arith.constant 0 : index
    %1 = vector.load %arg1[%c0, %c0_0, %c0_1] : memref<1x3x16xf32, #tpu.memory_space<vmem>>, vector<1x3x16xf32>
    %2 = vector.shape_cast %1 : vector<1x3x16xf32> to vector<3x16xf32>
    %c0_2 = arith.constant 0 : index
    %c0_3 = arith.constant 0 : index
    %3 = vector.load %arg3[%c0_2, %c0_3] : memref<3x16xf32, #tpu.memory_space<vmem>>, vector<3x16xf32>
    tpu.vector_store %arg3[%c0_2, %c0_3], %2 {strides = array<i32>} : memref<3x16xf32, #tpu.memory_space<vmem>>, vector<3x16xf32>,
    %cst = arith.constant 1.000000e+10 : f32
    %4 = vector.broadcast %cst : f32 to vector<1x16xf32>
    %c0_4 = arith.constant 0 : index
    %c0_5 = arith.constant 0 : index
    %5 = vector.load %arg4[%c0_4, %c0_5] : memref<1x16xf32, #tpu.memory_space<vmem>>, vector<1x16xf32>
    tpu.vector_store %arg4[%c0_4, %c0_5], %4 {strides = array<i32>} : memref<1x16xf32, #tpu.memory_space<vmem>>, vector<1x16xf32>,
    %c0_i32 = arith.constant 0 : i32
    %c0_i32_6 = arith.constant 0 : i32
    %c8_i32 = arith.constant 8 : i32
    %6 = arith.addi %c0_i32_6, %c8_i32 : i32
    %c1_i32 = arith.constant 1 : i32
    %7 = scf.for %arg5 = %c0_i32_6 to %6 step %c1_i32 iter_args(%arg6 = %c0_i32) -> (i32)  : i32 {
      %c0_8 = arith.constant 0 : index
      %c0_9 = arith.constant 0 : index
      %8 = vector.load %arg3[%c0_8, %c0_9] : memref<3x16xf32, #tpu.memory_space<vmem>>, vector<3x16xf32>
      %9 = vector.broadcast %arg6 : i32 to vector<1x16xi32>
      %10 = arith.cmpi eq, %0, %9 : vector<1x16xi32>
      %cst_10 = arith.constant 0.000000e+00 : f32
      %11 = vector.shape_cast %10 : vector<1x16xi1> to vector<1x16xi1>
      %12 = vector.broadcast %11 : vector<1x16xi1> to vector<3x16xi1>
      %13 = vector.broadcast %cst_10 : f32 to vector<3x16xf32>
      %14 = arith.select %12, %8, %13 : vector<3x16xi1>, vector<3x16xf32>
      %cst_11 = arith.constant dense<0.000000e+00> : vector<3xf32>
      %15 = vector.multi_reduction <add>, %14, %cst_11 [1] : vector<3x16xf32> to vector<3xf32>
      %16 = vector.shape_cast %15 : vector<3xf32> to vector<3x1xf32>
      %17 = tpu.transpose %16, [1, 0] : vector<3x1xf32> -> vector<1x3xf32>
      %c0_12 = arith.constant 0 : index
      %18 = arith.index_cast %arg5 : i32 to index
      %c0_13 = arith.constant 0 : index
      %19 = vector.load %arg2[%c0_12, %18, %c0_13] : memref<1x8x3xf32, #tpu.memory_space<vmem>>, vector<1x1x3xf32>
      %20 = vector.shape_cast %19 : vector<1x1x3xf32> to vector<1x3xf32>
      %21 = vector.shape_cast %17 : vector<1x3xf32> to vector<1x1x3xf32>
      tpu.vector_store %arg2[%c0_12, %18, %c0_13], %21 {strides = array<i32>} : memref<1x8x3xf32, #tpu.memory_space<vmem>>, vector<1x1x3xf32>,
      %22 = vector.broadcast %16 : vector<3x1xf32> to vector<3x16xf32>
      %23 = arith.subf %8, %22 : vector<3x16xf32>
      %24 = arith.mulf %23, %23 : vector<3x16xf32>
      %cst_14 = arith.constant dense<0.000000e+00> : vector<16xf32>
      %25 = vector.multi_reduction <add>, %24, %cst_14 [0] : vector<3x16xf32> to vector<16xf32>
      %26 = vector.shape_cast %25 : vector<16xf32> to vector<1x16xf32>
      %c0_15 = arith.constant 0 : index
      %c0_16 = arith.constant 0 : index
      %27 = vector.load %arg4[%c0_15, %c0_16] : memref<1x16xf32, #tpu.memory_space<vmem>>, vector<1x16xf32>
      %28 = arith.minimumf %27, %26 : vector<1x16xf32>
      %c0_17 = arith.constant 0 : index
      %c0_18 = arith.constant 0 : index
      %29 = vector.load %arg4[%c0_17, %c0_18] : memref<1x16xf32, #tpu.memory_space<vmem>>, vector<1x16xf32>
      tpu.vector_store %arg4[%c0_17, %c0_18], %28 {strides = array<i32>} : memref<1x16xf32, #tpu.memory_space<vmem>>, vector<1x16xf32>,
      %30 = vector.shape_cast %28 : vector<1x16xf32> to vector<1x1x16xf32>
      %cst_19 = arith.constant dense<0xFF800000> : vector<1xf32>
      %31 = vector.multi_reduction <maximumf>, %30, %cst_19 [1, 2] : vector<1x1x16xf32> to vector<1xf32>
      %32 = vector.shape_cast %31 : vector<1xf32> to vector<1x1x1xf32>
      %33 = vector.extract %32[0, 0, 0] : f32 from vector<1x1x1xf32>
      %34 = vector.broadcast %33 : f32 to vector<1x16xf32>
      %35 = arith.cmpf oeq, %28, %34 : vector<1x16xf32>
      %c16_i32 = arith.constant 16 : i32
      %36 = vector.broadcast %c16_i32 : i32 to vector<1x16xi32>
      %37 = arith.select %35, %0, %36 : vector<1x16xi1>, vector<1x16xi32>
      %38 = vector.shape_cast %37 : vector<1x16xi32> to vector<1x1x16xi32>
      %cst_20 = arith.constant dense<2147483647> : vector<1xi32>
      %39 = vector.multi_reduction <minsi>, %38, %cst_20 [1, 2] : vector<1x1x16xi32> to vector<1xi32>
      %40 = vector.shape_cast %39 : vector<1xi32> to vector<1x1x1xi32>
      %41 = vector.extract %40[0, 0, 0] : i32 from vector<1x1x1xi32>
      scf.yield %41 : i32
    }
    %c8_i32_7 = arith.constant 8 : i32
    return
  }
  func.func @transform_0(%arg0: i32) -> (i32, i32, i32) {
    %c0_i32 = arith.constant 0 : i32
    %c0_i32_0 = arith.constant 0 : i32
    %c0_i32_1 = arith.constant 0 : i32
    return %arg0, %c0_i32, %c0_i32_0 : i32, i32, i32
  }
  func.func @transform_1(%arg0: i32) -> (i32, i32, i32) {
    %c0_i32 = arith.constant 0 : i32
    %c0_i32_0 = arith.constant 0 : i32
    %c0_i32_1 = arith.constant 0 : i32
    return %arg0, %c0_i32, %c0_i32_0 : i32, i32, i32
  }
}

</mosaic_0001>

<llo_original>
// kernel: tpu_custom_call.1
$region0: #{tpu_custom_call.1}
  #allocation0 [shape = 'u32[]', space=smem, size = 0x4, offset = 0x4, fixed_abs, tag = 'smem constant byte address 0x4 - core index']
  #allocation1 [shape = 'u32[144,128]{1,0:T(1,128)}', space=vmem, size = 0x12000, scoped, tag = 'internal scratch']
  #allocation2 [shape = 'f32[3,16]{1,0:T(4,128)}', space=vmem, size = 0x800, scoped, tag = 'scratch operand']
  #allocation3 [shape = 'f32[1,16]{1,0:T(1,128)}', space=vmem, size = 0x200, scoped, tag = 'scratch operand']
  %s0 = inlined_call_operand.vmem [shape: f32[2,3,16], index: 0, kind: input, shape index: {}]
  %s1 = inlined_call_operand.vmem [shape: f32[2,8,3], index: 1, kind: output, shape index: {}]
  %s2 = sld [smem:[#allocation0]]
  $region44: #{tpu_custom_call.1} parent=0
    _
  %s4 = ssub.s32 1, %s2
  %s5 = scalar_select 0, %s4, %s2
  loop: start=0, step=1, limit=4
  $region2: #{tpu_custom_call.1} parent=0 // loop_pre_header
    _
  $region3: #{tpu_custom_call.1} parent=0 // loop_header
    %s7 = sphi 0, %s11
    %p8 = scmp.ge.s32.totalorder %s7, 4
    %s17 = sphi 0, %s19
    %s20 = sphi 0, %s17
    %s21 = sphi 0, %s20
    %s37 = sphi 0, %s21
    %s43 = sphi 0, %s45
    %s46 = sphi 0, %s43
    %s47 = sphi 0, %s46
    %s63 = sphi 0, %s47
  $region4: #{tpu_custom_call.1} parent=0 // loop_header_branch
    %10 = sbr.rel (%p8) target = $region8
  $region5: #{tpu_custom_call.1} parent=0 // loop_body
    %s12 = ssub.s32 %s7, 1
    %s13 = ssub.s32 %s7, 2
    %s14 = sadd.s32 %s7, 1
    %s15 = ssub.s32 %s7, %s14
    %p16 = scmp.eq.s32.totalorder %s15, 0
    %s18 = sadd.s32 %s17, 1
    %s19 = scalar_select %p16, %s17, %s18
    %p22 = pneg %p16
    %p23 = scmp.eq.s32.totalorder %s7, 1
    %p24 = por %p22, %p23
    %p25 = scmp.ne.s32.totalorder %s17, %s20
    %p26 = scmp.eq.s32.totalorder %s7, 0
    %p27 = por %p25, %p26
    %p28 = scmp.ne.s32.totalorder %s17, %s20
    %p29 = scmp.eq.s32.totalorder %s12, 1
    %p30 = por %p28, %p29
    %p31 = scmp.ne.s32.totalorder %s20, %s21
    %p32 = scmp.eq.s32.totalorder %s12, 0
    %p33 = por %p31, %p32
    %p34 = scmp.ne.s32.totalorder %s20, %s21
    %p35 = scmp.eq.s32.totalorder %s13, 1
    %p36 = por %p34, %p35
    %p38 = scmp.ne.s32.totalorder %s21, %s37
    %p39 = scmp.eq.s32.totalorder %s13, 0
    %p40 = por %p38, %p39
    %s41 = ssub.s32 %s7, %s14
    %p42 = scmp.eq.s32.totalorder %s41, 0
    %s44 = sadd.s32 %s43, 1
    %s45 = scalar_select %p42, %s43, %s44
    %p48 = pneg %p42
    %p49 = scmp.eq.s32.totalorder %s7, 1
    %p50 = por %p48, %p49
    %p51 = scmp.ne.s32.totalorder %s43, %s46
    %p52 = scmp.eq.s32.totalorder %s7, 0
    %p53 = por %p51, %p52
    %p54 = scmp.ne.s32.totalorder %s43, %s46
    %p55 = scmp.eq.s32.totalorder %s12, 1
    %p56 = por %p54, %p55
    %p57 = scmp.ne.s32.totalorder %s46, %s47
    %p58 = scmp.eq.s32.totalorder %s12, 0
    %p59 = por %p57, %p58
    %p60 = scmp.ne.s32.totalorder %s46, %s47
    %p61 = scmp.eq.s32.totalorder %s13, 1
    %p62 = por %p60, %p61
    %p64 = scmp.ne.s32.totalorder %s47, %s63
    %p65 = scmp.eq.s32.totalorder %s13, 0
    %p66 = por %p64, %p65
    %p67 = scmp.le.s32.totalorder 1, %s7
    %p68 = scmp.lt.s32.totalorder %s7, 3
    %p69 = pnand %p67, %p68
    %p70 = pneg %p69
    // Predicated region
    $region9: #{tpu_custom_call.1} parent=5 // pred_check
      _
    $region10: #{tpu_custom_call.1} parent=5 // pred_check_branch
      %72 = sbr.rel (%p69) target = $region12
    $region11: #{tpu_custom_call.1} parent=5 // pred_region
      %s73 = ssub.s32 %s7, 1
    $region12: #{tpu_custom_call.1} parent=5 // pred_fallthru
      _
    %p74 = scmp.lt.s32.totalorder %s7, 2
    // Predicated region
    $region13: #{tpu_custom_call.1} parent=5 // pred_check
      %p75 = pneg %p74
    $region14: #{tpu_custom_call.1} parent=5 // pred_check_branch
      %77 = sbr.rel (%p75) target = $region16
    $region15: #{tpu_custom_call.1} parent=5 // pred_region
      // Predicated region
      $region17: #{tpu_custom_call.1} parent=15 // pred_check
        %p78 = pneg %p27
      $region18: #{tpu_custom_call.1} parent=15 // pred_check_branch
        %80 = sbr.rel (%p78) target = $region20
      $region19: #{tpu_custom_call.1} parent=15 // pred_region
        %p81 = scmp.lt.s32.totalorder %s7, 1
        %s82 = scalar_select %p81, %s7, 1
        %s83 = smul.addr %s82, 4
        %s84 = scalar_lea.vmem %s0, %s83
      $region20: #{tpu_custom_call.1} parent=15 // pred_fallthru
        _
    $region16: #{tpu_custom_call.1} parent=5 // pred_fallthru
      _
    %p85 = scmp.le.s32.totalorder 1, %s7
    %p86 = scmp.lt.s32.totalorder %s7, 3
    %p87 = pnand %p85, %p86
    %p88 = pneg %p87
    // Predicated region
    $region21: #{tpu_custom_call.1} parent=5 // pred_check
      _
    $region22: #{tpu_custom_call.1} parent=5 // pred_check_branch
      %90 = sbr.rel (%p87) target = $region24
    $region23: #{tpu_custom_call.1} parent=5 // pred_region
      %s91 = ssub.s32 %s7, 1
      %p92 = scmp.lt.s32.totalorder %s12, 1
      %s93 = scalar_select %p92, %s12, 1
      %s94 = smul.addr %s93, 4
      %s95 = scalar_lea.vmem %s0, %s94
      %p96 = pneg %p33
      %p97 = pneg %p30
      %p98 = pneg %p59
      %p99 = pneg %p56
      %p100 = scmp.lt.s32.totalorder %s12, 1
      %s101 = scalar_select %p100, %s12, 1
      %s102 = smul.addr %s101, 8
      %s103 = scalar_lea.vmem %s1, %s102
      %p104 = scmp.lt.s32.totalorder %s12, 1
      %s105 = scalar_select %p104, %s12, 1
      %s106 = smul.addr %s105, 4
      %s107 = scalar_lea.vmem %s0, %s106
      %p108 = scmp.lt.s32.totalorder %s12, 1
      %s109 = scalar_select %p108, %s12, 1
      %s110 = smul.addr %s109, 8
      %s111 = scalar_lea.vmem %s1, %s110
      %v112 = vlaneseq
      %v113 = vand.u32 %v112, 127
      %v114 = vld [vmem:[%s107] sm:$0x7]
      %vm115 = vcmask 124928
      %116 = vst.msk [vmem:[#allocation2] sm:$0x7] %vm115, %v114
      %vm117 = vcmask 122880
      %118 = vst.msk [vmem:[#allocation3] sm:$0x1] %vm117, 1e+10
      loop: start=0, step=1, limit=8
      $region25: #{tpu_custom_call.1} parent=23 // loop_pre_header
        _
      $region26: #{tpu_custom_call.1} parent=23 // loop_header
        %s120 = sphi 0, %s124
        %p121 = scmp.ge.s32.totalorder %s120, 8
        %s125 = sphi 0, %s219
      $region27: #{tpu_custom_call.1} parent=23 // loop_header_branch
        %123 = sbr.rel (%p121) target = $region31
      $region28: #{tpu_custom_call.1} parent=23 // loop_body
        %v126 = vld [vmem:[#allocation2] sm:$0x7]
        %v127 = vstv %s125
        %vm128 = vcmp.eq.s32.totalorder %v113, %v127
        %v129 = vsel %vm128, 1, 0
        %vm130 = vcmp.eq.s32.totalorder %v129, 1
        %v131 = vsel %vm130, %v126, 0.0
        %v132 = vsel %vm115, %v131, 0.0
        %133 = vadd.xlane.f32.xlu0 %v132
        %v134 = vpop.xlane.xlu0 %133
        %135 = vxpose.xlu0.b32.start [1/16] %v134, 128
        %136 = vxpose.xlu0.b32.cont [2/16] 0.0, 128
        %137 = vxpose.xlu0.b32.cont [3/16] 0.0, 128
        %138 = vxpose.xlu0.b32.cont [4/16] 0.0, 128
        %139 = vxpose.xlu0.b32.cont [5/16] 0.0, 128
        %140 = vxpose.xlu0.b32.cont [6/16] 0.0, 128
        %141 = vxpose.xlu0.b32.cont [7/16] 0.0, 128
        %142 = vxpose.xlu0.b32.cont [8/16] 0.0, 128
        %143 = vxpose.xlu0.b32.cont [9/16] 0.0, 128
        %144 = vxpose.xlu0.b32.cont [10/16] 0.0, 128
        %145 = vxpose.xlu0.b32.cont [11/16] 0.0, 128
        %146 = vxpose.xlu0.b32.cont [12/16] 0.0, 128
        %147 = vxpose.xlu0.b32.cont [13/16] 0.0, 128
        %148 = vxpose.xlu0.b32.cont [14/16] 0.0, 128
        %149 = vxpose.xlu0.b32.cont [15/16] 0.0, 128
        %150 = vxpose.xlu0.b32.end [16/16] 0.0, 128
        %v151 = vpop.trf.xlu0
        %v152 = vpop.trf.xlu0
        %v153 = vpop.trf.xlu0
        %v154 = vpop.trf.xlu0
        %v155 = vpop.trf.xlu0
        %v156 = vpop.trf.xlu0
        %v157 = vpop.trf.xlu0
        %v158 = vpop.trf.xlu0
        %v159 = vpop.trf.xlu0
        %v160 = vpop.trf.xlu0
        %v161 = vpop.trf.xlu0
        %v162 = vpop.trf.xlu0
        %v163 = vpop.trf.xlu0
        %v164 = vpop.trf.xlu0
        %v165 = vpop.trf.xlu0
        %v166 = vpop.trf.xlu0
        %s167 = scalar_lea.vmem %s111, %s120
        %vm168 = vcmask 16384
        %169 = vst.msk [vmem:[%s167] sm:$0x1] %vm168, %v151
        %v170 = vsub.f32 %v126, %v134
        %v171 = vmul.f32 %v170, %v170
        %v172 = vsel %vm115, %v171, 0.0
        %v173 = vrot.slane %v172, 4
        %v174 = vadd.f32 %v172, %v173
        %v175 = vrot.slane %v174, 2
        %v176 = vadd.f32 %v174, %v175
        %v177 = vrot.slane %v176, 1
        %v178 = vadd.f32 %v176, %v177
        %v179 = vld [vmem:[#allocation3] sm:$0x1]
        %v180 = vmin.f32 %v179, %v178
        %181 = vst.msk [vmem:[#allocation3] sm:$0x1] %vm117, %v180
        %v182 = vsel %vm117, %v180, -inf
        %183 = vmax.xlane.f32.xlu0 %v182
        %v184 = vpop.xlane.xlu0 %183
        %v185 = vrot.slane %v184, 4
        %v186 = vmax.f32 %v184, %v185
        %v187 = vrot.slane %v186, 2
        %v188 = vmax.f32 %v186, %v187
        %v189 = vrot.slane %v188, 1
        %v190 = vmax.f32 %v188, %v189
        %s191 = vtos %v190
        %v192 = vstv %s191
        %vm193 = vcmp.eq.f32.partialorder %v180, %v192
        %v194 = vsel %vm193, %v113, 16
        %v195 = vsel %vm117, %v194, 2147483647
        %v196 = vand.u32 %v195, 65535
        %v197 = vshra.s32 %v195, 16
        %v198 = vcvt.s32.f32 %v196
        %v199 = vcvt.s32.f32 %v197
        %200 = vmin.xlane.f32.xlu0 %v199
        %v201 = vpop.xlane.xlu0 %200
        %vm202 = vcmp.eq.f32.partialorder %v199, %v201
        %v203 = vsel %vm202, %v198, inf
        %204 = vmin.xlane.f32.xlu0 %v203
        %v205 = vpop.xlane.xlu0 %204
        %v206 = vcvt.f32.s32 %v205
        %v207 = vcvt.f32.s32 %v201
        %v208 = vshll.u32 %v207, 16
        %v209 = vadd.s32 %v208, %v206
        %v210 = vrot.slane %v209, 4
        %vm211 = vcmp.lt.s32.totalorder %v209, %v210
        %v212 = vsel %vm211, %v209, %v210
        %v213 = vrot.slane %v212, 2
        %vm214 = vcmp.lt.s32.totalorder %v212, %v213
        %v215 = vsel %vm214, %v212, %v213
        %v216 = vrot.slane %v215, 1
        %vm217 = vcmp.lt.s32.totalorder %v215, %v216
        %v218 = vsel %vm217, %v215, %v216
        %s219 = vtos %v218
      $region29: #{tpu_custom_call.1} parent=23 // loop_footer
        %s124 = sadd.s32 1, %s120
      $region30: #{tpu_custom_call.1} parent=23 // loop_footer_branch
        %119 = sbr.rel target = $region26
      $region31: #{tpu_custom_call.1} parent=23 // loop_exit
        _
      %p220 = scmp.lt.s32.totalorder %s12, 1
      %s221 = scalar_select %p220, %s12, 1
      %s222 = smul.addr %s221, 8
      %s223 = scalar_lea.vmem %s1, %s222
      // Predicated region
      $region32: #{tpu_custom_call.1} parent=23 // pred_check
        %p224 = pneg %p56
      $region33: #{tpu_custom_call.1} parent=23 // pred_check_branch
        %226 = sbr.rel (%p224) target = $region35
      $region34: #{tpu_custom_call.1} parent=23 // pred_region
        _
      $region35: #{tpu_custom_call.1} parent=23 // pred_fallthru
        _
    $region24: #{tpu_custom_call.1} parent=5 // pred_fallthru
      _
    %p227 = scmp.le.s32.totalorder 2, %s7
    // Predicated region
    $region36: #{tpu_custom_call.1} parent=5 // pred_check
      %p228 = pneg %p227
    $region37: #{tpu_custom_call.1} parent=5 // pred_check_branch
      %230 = sbr.rel (%p228) target = $region39
    $region38: #{tpu_custom_call.1} parent=5 // pred_region
      %s231 = ssub.s32 %s7, 2
      // Predicated region
      $region40: #{tpu_custom_call.1} parent=38 // pred_check
        %p232 = pneg %p62
      $region41: #{tpu_custom_call.1} parent=38 // pred_check_branch
        %234 = sbr.rel (%p232) target = $region43
      $region42: #{tpu_custom_call.1} parent=38 // pred_region
        %p235 = scmp.lt.s32.totalorder %s13, 1
        %s236 = scalar_select %p235, %s13, 1
        %s237 = smul.addr %s236, 8
        %s238 = scalar_lea.vmem %s1, %s237
      $region43: #{tpu_custom_call.1} parent=38 // pred_fallthru
        _
    $region39: #{tpu_custom_call.1} parent=5 // pred_fallthru
      _
  $region6: #{tpu_custom_call.1} parent=0 // loop_footer
    %s11 = sadd.s32 1, %s7
  $region7: #{tpu_custom_call.1} parent=0 // loop_footer_branch
    %6 = sbr.rel target = $region3
  $region8: #{tpu_custom_call.1} parent=0 // loop_exit
    _

</llo_original>
